<compile_context>
chip_gen: v5e
topology: v5e:2x2
jax: 0.10.0
libtpu: 0.0.40
codegen_flags: <defaults>
</compile_context>

<pallas_src>
import functools
from typing import NamedTuple, Optional

import jax
import jax.numpy as jnp
from jax.experimental import pallas as pl
from jax.experimental.pallas import tpu as pltpu


def _round_up(x, m):
    return ((x + m - 1) // m) * m


def _padded_tile_bytes(rows, cols, itemsize):
    # (sublane, 128)-tile padded VMEM footprint of a 2-D block (per-dtype sublane rounding).
    sub = {4: 8, 2: 16, 1: 32}.get(int(itemsize), 8)
    return _round_up(max(int(rows), 1), sub) * _round_up(max(int(cols), 1), 128) * int(itemsize)


def _preferred_out_lanes():
    # 256-lane packed output rows fill the 2x256 MXU on v6e/v7x; v5e's MXU is 128 wide.
    try:
        kind = jax.devices()[0].device_kind.lower()
    except Exception:
        return 128
    return 128 if "v5" in kind else 256


def _choose_pack(d, e_pad, lanes):
    for target in (lanes, 128):
        if d < target and target % d == 0:
            pack = target // d
            # Keep the fused K dimension (pack * e_pad) to a couple of MXU K-tiles.
            while pack > 1 and pack * e_pad > 1024:
                pack //= 2
            return max(pack, 1)
    return 1


class PreparedDoubleEmbedding(NamedTuple):
    offsets: jax.Array                 # (A,) int32
    emb_table: jax.Array               # (E, D) original table (XLA fallback path)
    tab_bd: Optional[jax.Array]        # (pack*e_pad, pack*d) block-diagonal MXU table
    pack: int
    e_pad: int


def prepare_double_embedding(offsets, emb_table, *, lanes=None, max_e_pad=256):
    """Build the block-diagonal MXU table ONCE (avoid per-call HBM re-pad)."""
    e, d = int(emb_table.shape[0]), int(emb_table.shape[1])
    e_pad = _round_up(e, 8)
    offsets = offsets.astype(jnp.int32)
    if e_pad > max_e_pad:
        # TODO(synk): manual row-gather DMA path (memory_space=pl.ANY + pltpu.make_async_copy)
        # for tall tables; the one-hot MXU path scales O(n*e_pad) so it is gated off here.
        return PreparedDoubleEmbedding(offsets, emb_table, None, 1, e_pad)
    if lanes is None:
        lanes = _preferred_out_lanes()
    pack = _choose_pack(d, e_pad, lanes)
    tab_pad = jnp.pad(emb_table, ((0, e_pad - e), (0, 0)))        # (e_pad, d)
    if pack == 1:
        tab_bd = tab_pad
    else:
        # Block-diagonal replica: row j*e_pad + r holds table row r in columns [j*d,(j+1)*d).
        tab_bd = jnp.kron(jnp.eye(pack, dtype=emb_table.dtype), tab_pad)
    return PreparedDoubleEmbedding(offsets, emb_table, tab_bd, pack, e_pad)


def _double_embedding_kernel(idx_ref, tab_ref, out_ref, *, pack, e_pad):
    """Gather tbp*pack embedding rows with ONE one-hot @ block-diagonal-table MXU matmul.

    idx_ref : (tbp, pack) int32   row indices, pre-biased by j*e_pad per packed slot j
    tab_ref : (pack*e_pad, pack*d) block-diagonal table, resident in VMEM
    out_ref : (tbp, pack*d)       packed, lane-dense output slab
    """
    idx = idx_ref[...]                                 # (tbp, pack) int32 (pre-biased)
    tab = tab_ref[...]                                 # (kdim, pack*d)
    tbp = idx.shape[0]
    kdim = pack * e_pad
    if pack == 1:
        idx_rep = jnp.broadcast_to(idx, (tbp, e_pad))
    else:
        # Lane-expand the pack indices to the fused K width (cheap lane broadcasts + one concat).
        idx_rep = jnp.concatenate(
            [jnp.broadcast_to(idx[:, j:j + 1], (tbp, e_pad)) for j in range(pack)], axis=1)
    lane = jax.lax.broadcasted_iota(jnp.int32, (tbp, kdim), 1)
    onehot = (idx_rep == lane).astype(tab.dtype)
    # Single K=pack*e_pad, N=pack*d matmul -> lane-dense output slab directly (no concat).
    out_ref[...] = jnp.dot(onehot, tab,
                           preferred_element_type=jnp.float32).astype(out_ref.dtype)


def double_embedding_forward(asset_index, shape_index, offsets, emb_table,
                             *, prepared=None, block_rows=None, use_pallas=None):
    """indices = offsets[asset_index] + shape_index ; return emb_table[indices]."""
    orig_shape = asset_index.shape
    a = asset_index.reshape(-1).astype(jnp.int32)      # torch .to(torch.long) equivalent
    s = shape_index.reshape(-1).astype(jnp.int32)
    if prepared is None:
        prepared = prepare_double_embedding(offsets, emb_table)
    idx = prepared.offsets[a] + s                      # combined row index
    n = int(idx.shape[0])
    e, d = int(emb_table.shape[0]), int(emb_table.shape[1])
    dt = emb_table.dtype
    itemsize = int(jnp.dtype(dt).itemsize)

    if n == 0:
        return jnp.zeros(orig_shape + (d,), dt)

    mxu_ok = prepared.tab_bd is not None
    if use_pallas is None:
        # Small-n fast path: XLA's fused gather beats kernel-launch overhead there.
        use_pallas = mxu_ok and (n * d * itemsize >= 64 * 1024)
    if use_pallas and not mxu_ok:
        use_pallas = False
    if not use_pallas:
        return emb_table[idx].reshape(orig_shape + (d,))

    pack, e_pad = prepared.pack, prepared.e_pad
    kdim, nd = pack * e_pad, pack * d
    align = 8 * pack                                   # sublane-align the packed row count

    if block_rows is None:
        block_rows = (1 << 20) // max(d * itemsize, 1)  # ~1 MiB of output per grid step
    block_rows = max(1, min(int(block_rows), 32768))
    tb = _round_up(min(block_rows, n), align)
    n_pad = _round_up(n, tb)
    g = n_pad // tb
    tbp = tb // pack
    rows_packed = n_pad // pack

    # Clip keeps the one-hot inside its own table block (module asserts validity anyway;
    # this just prevents cross-block aliasing for bad inputs -- no torch-style assert).
    idx = jnp.clip(idx, 0, e_pad - 1)
    idx_pad = jnp.pad(idx, (0, n_pad - n))              # pad rows gather row 0 (discarded)
    bias = (jnp.arange(pack, dtype=jnp.int32) * e_pad)[None, :]
    idx2 = idx_pad.reshape(rows_packed, pack) + bias    # pre-biased packed indices (4B/row HBM)

    # Generation-aware VMEM budget (conservative 64 MiB fallback = v7x per-core VMEM).
    try:
        vmem_cap = int(pltpu.get_tpu_info().vmem_capacity_bytes)
    except Exception:
        vmem_cap = 64 << 20
    needed = (2 * _padded_tile_bytes(kdim, nd, itemsize)      # table (worst case 2 buffers)
              + 2 * _padded_tile_bytes(tbp, pack, 4)          # double-buffered idx blocks
              + 2 * _padded_tile_bytes(tbp, nd, itemsize))    # double-buffered out blocks
    vmem_limit = int(min(int(0.85 * vmem_cap), max(16 << 20, needed + (4 << 20))))

    kernel = functools.partial(_double_embedding_kernel, pack=pack, e_pad=e_pad)

    def _call(single_buffer_table):
        table_kwargs = dict(pipeline_mode=pl.Buffered(1)) if single_buffer_table else {}
        return pl.pallas_call(
            kernel,
            out_shape=jax.ShapeDtypeStruct((rows_packed, nd), dt),
            grid_spec=pltpu.PrefetchScalarGridSpec(
                num_scalar_prefetch=0,
                grid=(g,),
                in_specs=[
                    pl.BlockSpec((tbp, pack), lambda i: (i, 0)),            # packed index block
                    pl.BlockSpec((kdim, nd), lambda i: (0, 0), **table_kwargs),  # resident table
                ],
                out_specs=pl.BlockSpec((tbp, nd), lambda i: (i, 0)),        # lane-dense output
            ),
            compiler_params=pltpu.CompilerParams(
                dimension_semantics=("parallel",),       # shards across v7x's 2 TensorCores
                vmem_limit_bytes=vmem_limit,
            ),
        )(idx2, prepared.tab_bd)

    try:
        out_packed = _call(True)     # single-buffered resident table (constant index_map)
    except Exception:
        out_packed = _call(False)    # compiler rejected Buffered(1) -> default buffering

    out = out_packed.reshape(n_pad, d)[:n]               # free row-major reinterpretation
    return out.reshape(orig_shape + (d,))


if __name__ == "__main__":
    # ---- Deterministic, in-script DoubleEmbedding "parameters" ----
    asset_indices = {0: 3, 2: 5, 4: 2}
    embedding_dim = 32
    max_key = max(asset_indices.keys())

    sub_embedding_sizes = jnp.array(
        [asset_indices.get(k, 1) for k in range(max_key + 1)], dtype=jnp.int32)
    num_embeddings = int(sub_embedding_sizes.sum())                        # 12
    offsets = jnp.concatenate(
        [jnp.zeros((1,), jnp.int32),
         jnp.cumsum(sub_embedding_sizes[:-1])]).astype(jnp.int32)          # [0,3,4,9,10]

    key = jax.random.PRNGKey(0)
    k_emb, k_a, k_s = jax.random.split(key, 3)
    # nn.Embedding default init: N(0, 1)
    emb_table = jax.random.normal(k_emb, (num_embeddings, embedding_dim), dtype=jnp.float32)

    # Build the block-diagonal MXU table ONCE (not per forward call).
    prepared = prepare_double_embedding(offsets, emb_table)

    # ---- Example inputs (small shapes) ----
    batch, seq = 2, 8
    asset_index = jax.random.randint(k_a, (batch, seq), 0, max_key + 1, dtype=jnp.int32)
    raw = jax.random.randint(k_s, (batch, seq), 0, 1_000_000, dtype=jnp.int32)
    shape_index = raw % sub_embedding_sizes[asset_index]   # always valid

    # The module's forward assert, checked host-side.
    # TODO(synk): the torch runtime assert has no in-kernel equivalent without
    # pl.debug_check/enable_debug_checks; validated here on the host instead.
    assert bool(jnp.all(shape_index < sub_embedding_sizes[asset_index]))

    # 1) Pallas path (forced, single grid step).
    out = double_embedding_forward(asset_index, shape_index, offsets, emb_table,
                                   prepared=prepared, use_pallas=True)
    out = jax.block_until_ready(out)
    ref = emb_table[(offsets[asset_index] + shape_index).reshape(-1)]
    ref = ref.reshape(batch, seq, embedding_dim)
    assert out.shape == (batch, seq, embedding_dim)
    assert out.dtype == jnp.float32
    assert jnp.allclose(out, ref)

    # 2) Pallas path with a multi-step grid (small block_rows -> several blocks + padding).
    n2 = 1000
    k_a2, k_s2 = jax.random.split(jax.random.PRNGKey(1))
    asset2 = jax.random.randint(k_a2, (n2,), 0, max_key + 1, dtype=jnp.int32)
    shape2 = jax.random.randint(k_s2, (n2,), 0, 1 << 20, dtype=jnp.int32) % sub_embedding_sizes[asset2]
    out2 = double_embedding_forward(asset2, shape2, offsets, emb_table,
                                    prepared=prepared, use_pallas=True, block_rows=256)
    out2 = jax.block_until_ready(out2)
    ref2 = emb_table[offsets[asset2] + shape2]
    assert out2.shape == (n2, embedding_dim)
    assert jnp.allclose(out2, ref2)

    # 3) Default heuristic (tiny input -> XLA fast path), semantics must match too.
    out3 = jax.block_until_ready(
        double_embedding_forward(asset_index, shape_index, offsets, emb_table, prepared=prepared))
    assert jnp.allclose(out3, ref)

    print("KERNEL_OK")
</pallas_src>

<mosaic_0001>
module attributes {stable_mosaic.version = 11 : i64} {
  func.func @_double_embedding_kernel(%arg0: i32, %arg1: memref<8x8xi32, #tpu.memory_space<vmem>>, %arg2: memref<128x256xf32, #tpu.memory_space<vmem>>, %arg3: memref<8x256xf32, #tpu.memory_space<vmem>>) attributes {dimension_semantics = [#tpu.dimension_semantics<parallel>], iteration_bounds = array<i64: 1>, scalar_prefetch = 0 : i64, scratch_operands = 0 : i64, tpu.core_type = #tpu.core_type<tc>, window_params = [{transform_indices = @transform_0, window_bounds = array<i64: 8, 8>}, {pipeline_mode = #tpu.pipeline_mode<synchronous>, transform_indices = @transform_1, window_bounds = array<i64: 128, 256>}, {transform_indices = @transform_2, window_bounds = array<i64: 8, 256>}]} {
    %c0 = arith.constant 0 : index
    %c0_0 = arith.constant 0 : index
    %0 = vector.load %arg1[%c0, %c0_0] : memref<8x8xi32, #tpu.memory_space<vmem>>, vector<8x8xi32>
    %c0_1 = arith.constant 0 : index
    %c0_2 = arith.constant 0 : index
    %1 = vector.load %arg2[%c0_1, %c0_2] : memref<128x256xf32, #tpu.memory_space<vmem>>, vector<128x256xf32>
    %2 = vector.extract_strided_slice %0 {offsets = [0, 0], sizes = [8, 1], strides = [1, 1]} : vector<8x8xi32> to vector<8x1xi32>
    %3 = vector.shape_cast %2 : vector<8x1xi32> to vector<8x1xi32>
    %4 = vector.broadcast %3 : vector<8x1xi32> to vector<8x16xi32>
    %5 = vector.extract_strided_slice %0 {offsets = [0, 1], sizes = [8, 1], strides = [1, 1]} : vector<8x8xi32> to vector<8x1xi32>
    %6 = vector.shape_cast %5 : vector<8x1xi32> to vector<8x1xi32>
    %7 = vector.broadcast %6 : vector<8x1xi32> to vector<8x16xi32>
    %8 = vector.extract_strided_slice %0 {offsets = [0, 2], sizes = [8, 1], strides = [1, 1]} : vector<8x8xi32> to vector<8x1xi32>
    %9 = vector.shape_cast %8 : vector<8x1xi32> to vector<8x1xi32>
    %10 = vector.broadcast %9 : vector<8x1xi32> to vector<8x16xi32>
    %11 = vector.extract_strided_slice %0 {offsets = [0, 3], sizes = [8, 1], strides = [1, 1]} : vector<8x8xi32> to vector<8x1xi32>
    %12 = vector.shape_cast %11 : vector<8x1xi32> to vector<8x1xi32>
    %13 = vector.broadcast %12 : vector<8x1xi32> to vector<8x16xi32>
    %14 = vector.extract_strided_slice %0 {offsets = [0, 4], sizes = [8, 1], strides = [1, 1]} : vector<8x8xi32> to vector<8x1xi32>
    %15 = vector.shape_cast %14 : vector<8x1xi32> to vector<8x1xi32>
    %16 = vector.broadcast %15 : vector<8x1xi32> to vector<8x16xi32>
    %17 = vector.extract_strided_slice %0 {offsets = [0, 5], sizes = [8, 1], strides = [1, 1]} : vector<8x8xi32> to vector<8x1xi32>
    %18 = vector.shape_cast %17 : vector<8x1xi32> to vector<8x1xi32>
    %19 = vector.broadcast %18 : vector<8x1xi32> to vector<8x16xi32>
    %20 = vector.extract_strided_slice %0 {offsets = [0, 6], sizes = [8, 1], strides = [1, 1]} : vector<8x8xi32> to vector<8x1xi32>
    %21 = vector.shape_cast %20 : vector<8x1xi32> to vector<8x1xi32>
    %22 = vector.broadcast %21 : vector<8x1xi32> to vector<8x16xi32>
    %23 = vector.extract_strided_slice %0 {offsets = [0, 7], sizes = [8, 1], strides = [1, 1]} : vector<8x8xi32> to vector<8x1xi32>
    %24 = vector.shape_cast %23 : vector<8x1xi32> to vector<8x1xi32>
    %25 = vector.broadcast %24 : vector<8x1xi32> to vector<8x16xi32>
    %26 = tpu.concatenate %4, %7, %10, %13, %16, %19, %22, %25 in 1 : vector<8x16xi32>, vector<8x16xi32>, vector<8x16xi32>, vector<8x16xi32>, vector<8x16xi32>, vector<8x16xi32>, vector<8x16xi32>, vector<8x16xi32> -> vector<8x128xi32>
    %27 = tpu.iota {dimensions = array<i32: 1>} : vector<8x128xi32>
    %28 = arith.cmpi eq, %26, %27 : vector<8x128xi32>
    %29 = arith.extui %28 : vector<8x128xi1> to vector<8x128xi32>
    %30 = arith.sitofp %29 : vector<8x128xi32> to vector<8x128xf32>
    %cst = arith.constant dense<0.000000e+00> : vector<8x256xf32>
    %31 = tpu.matmul %30, %1, %cst {dimension_numbers = #tpu.dot_dimension_numbers<[1], [0], [0], [1], [0, 0, 1, 1], [], []>} : vector<8x128xf32>, vector<128x256xf32>, vector<8x256xf32> -> vector<8x256xf32>
    %c0_3 = arith.constant 0 : index
    %c0_4 = arith.constant 0 : index
    %32 = vector.load %arg3[%c0_3, %c0_4] : memref<8x256xf32, #tpu.memory_space<vmem>>, vector<8x256xf32>
    tpu.vector_store %arg3[%c0_3, %c0_4], %31 {strides = array<i32>} : memref<8x256xf32, #tpu.memory_space<vmem>>, vector<8x256xf32>,
    return
  }
  func.func @transform_0(%arg0: i32) -> (i32, i32) {
    %c0_i32 = arith.constant 0 : i32
    %c0_i32_0 = arith.constant 0 : i32
    return %arg0, %c0_i32 : i32, i32
  }
  func.func @transform_1(%arg0: i32) -> (i32, i32) {
    %c0_i32 = arith.constant 0 : i32
    %c0_i32_0 = arith.constant 0 : i32
    %c0_i32_1 = arith.constant 0 : i32
    return %c0_i32, %c0_i32_0 : i32, i32
  }
  func.func @transform_2(%arg0: i32) -> (i32, i32) {
    %c0_i32 = arith.constant 0 : i32
    %c0_i32_0 = arith.constant 0 : i32
    return %arg0, %c0_i32 : i32, i32
  }
}

module attributes {stable_mosaic.version = 11 : i64} {
  func.func @_double_embedding_kernel(%arg0: i32, %arg1: memref<8x8xi32, #tpu.memory_space<vmem>>, %arg2: memref<128x256xf32, #tpu.memory_space<vmem>>, %arg3: memref<8x256xf32, #tpu.memory_space<vmem>>) attributes {dimension_semantics = [#tpu.dimension_semantics<parallel>], iteration_bounds = array<i64: 1>, scalar_prefetch = 0 : i64, scratch_operands = 0 : i64, tpu.core_type = #tpu.core_type<tc>, window_params = [{transform_indices = @transform_0, window_bounds = array<i64: 8, 8>}, {pipeline_mode = #tpu.pipeline_mode<synchronous>, transform_indices = @transform_1, window_bounds = array<i64: 128, 256>}, {transform_indices = @transform_2, window_bounds = array<i64: 8, 256>}]} {
    %c0 = arith.constant 0 : index
    %c0_0 = arith.constant 0 : index
    %0 = vector.load %arg1[%c0, %c0_0] : memref<8x8xi32, #tpu.memory_space<vmem>>, vector<8x8xi32>
    %c0_1 = arith.constant 0 : index
    %c0_2 = arith.constant 0 : index
    %1 = vector.load %arg2[%c0_1, %c0_2] : memref<128x256xf32, #tpu.memory_space<vmem>>, vector<128x256xf32>
    %2 = vector.extract_strided_slice %0 {offsets = [0, 0], sizes = [8, 1], strides = [1, 1]} : vector<8x8xi32> to vector<8x1xi32>
    %3 = vector.shape_cast %2 : vector<8x1xi32> to vector<8x1xi32>
    %4 = vector.broadcast %3 : vector<8x1xi32> to vector<8x16xi32>
    %5 = vector.extract_strided_slice %0 {offsets = [0, 1], sizes = [8, 1], strides = [1, 1]} : vector<8x8xi32> to vector<8x1xi32>
    %6 = vector.shape_cast %5 : vector<8x1xi32> to vector<8x1xi32>
    %7 = vector.broadcast %6 : vector<8x1xi32> to vector<8x16xi32>
    %8 = vector.extract_strided_slice %0 {offsets = [0, 2], sizes = [8, 1], strides = [1, 1]} : vector<8x8xi32> to vector<8x1xi32>
    %9 = vector.shape_cast %8 : vector<8x1xi32> to vector<8x1xi32>
    %10 = vector.broadcast %9 : vector<8x1xi32> to vector<8x16xi32>
    %11 = vector.extract_strided_slice %0 {offsets = [0, 3], sizes = [8, 1], strides = [1, 1]} : vector<8x8xi32> to vector<8x1xi32>
    %12 = vector.shape_cast %11 : vector<8x1xi32> to vector<8x1xi32>
    %13 = vector.broadcast %12 : vector<8x1xi32> to vector<8x16xi32>
    %14 = vector.extract_strided_slice %0 {offsets = [0, 4], sizes = [8, 1], strides = [1, 1]} : vector<8x8xi32> to vector<8x1xi32>
    %15 = vector.shape_cast %14 : vector<8x1xi32> to vector<8x1xi32>
    %16 = vector.broadcast %15 : vector<8x1xi32> to vector<8x16xi32>
    %17 = vector.extract_strided_slice %0 {offsets = [0, 5], sizes = [8, 1], strides = [1, 1]} : vector<8x8xi32> to vector<8x1xi32>
    %18 = vector.shape_cast %17 : vector<8x1xi32> to vector<8x1xi32>
    %19 = vector.broadcast %18 : vector<8x1xi32> to vector<8x16xi32>
    %20 = vector.extract_strided_slice %0 {offsets = [0, 6], sizes = [8, 1], strides = [1, 1]} : vector<8x8xi32> to vector<8x1xi32>
    %21 = vector.shape_cast %20 : vector<8x1xi32> to vector<8x1xi32>
    %22 = vector.broadcast %21 : vector<8x1xi32> to vector<8x16xi32>
    %23 = vector.extract_strided_slice %0 {offsets = [0, 7], sizes = [8, 1], strides = [1, 1]} : vector<8x8xi32> to vector<8x1xi32>
    %24 = vector.shape_cast %23 : vector<8x1xi32> to vector<8x1xi32>
    %25 = vector.broadcast %24 : vector<8x1xi32> to vector<8x16xi32>
    %26 = tpu.concatenate %4, %7, %10, %13, %16, %19, %22, %25 in 1 : vector<8x16xi32>, vector<8x16xi32>, vector<8x16xi32>, vector<8x16xi32>, vector<8x16xi32>, vector<8x16xi32>, vector<8x16xi32>, vector<8x16xi32> -> vector<8x128xi32>
    %27 = tpu.iota {dimensions = array<i32: 1>} : vector<8x128xi32>
    %28 = arith.cmpi eq, %26, %27 : vector<8x128xi32>
    %29 = arith.extui %28 : vector<8x128xi1> to vector<8x128xi32>
    %30 = arith.sitofp %29 : vector<8x128xi32> to vector<8x128xf32>
    %cst = arith.constant dense<0.000000e+00> : vector<8x256xf32>
    %31 = tpu.matmul %30, %1, %cst {dimension_numbers = #tpu.dot_dimension_numbers<[1], [0], [0], [1], [0, 0, 1, 1], [], []>} : vector<8x128xf32>, vector<128x256xf32>, vector<8x256xf32> -> vector<8x256xf32>
    %c0_3 = arith.constant 0 : index
    %c0_4 = arith.constant 0 : index
    %32 = vector.load %arg3[%c0_3, %c0_4] : memref<8x256xf32, #tpu.memory_space<vmem>>, vector<8x256xf32>
    tpu.vector_store %arg3[%c0_3, %c0_4], %31 {strides = array<i32>} : memref<8x256xf32, #tpu.memory_space<vmem>>, vector<8x256xf32>,
    return
  }
  func.func @transform_0(%arg0: i32) -> (i32, i32) {
    %c0_i32 = arith.constant 0 : i32
    %c0_i32_0 = arith.constant 0 : i32
    return %arg0, %c0_i32 : i32, i32
  }
  func.func @transform_1(%arg0: i32) -> (i32, i32) {
    %c0_i32 = arith.constant 0 : i32
    %c0_i32_0 = arith.constant 0 : i32
    %c0_i32_1 = arith.constant 0 : i32
    return %c0_i32, %c0_i32_0 : i32, i32
  }
  func.func @transform_2(%arg0: i32) -> (i32, i32) {
    %c0_i32 = arith.constant 0 : i32
    %c0_i32_0 = arith.constant 0 : i32
    return %arg0, %c0_i32 : i32, i32
  }
}

</mosaic_0001>

<llo_original>
// kernel: tpu_custom_call.1
$region0: #{tpu_custom_call.1}
  #allocation0 [shape = 'u32[]', space=smem, size = 0x4, offset = 0x4, fixed_abs, tag = 'smem constant byte address 0x4 - core index']
  #allocation1 [shape = 'u32[72,128]{1,0:T(1,128)}', space=vmem, size = 0x9000, scoped, tag = 'internal scratch']
  %s0 = inlined_call_operand.hbm [shape: s32[8,8], index: 0, kind: input, shape index: {}]
  %s1 = inlined_call_operand.hbm [shape: f32[128,256], index: 1, kind: input, shape index: {}]
  %s2 = inlined_call_operand.hbm [shape: f32[8,256], index: 2, kind: output, shape index: {}]
  %s3 = sld [smem:[#allocation0]]
  $region26: #{tpu_custom_call.1} parent=0
    _
  %s5 = ssub.s32 1, %s3
  %s6 = scalar_select 0, %s5, %s3
  $region1: #{tpu_custom_call.1} parent=0
    #allocation2 [shape = 'u8[4096]{0}', space=vmem, size = 0x1000, scoped, tag = 'input window, operand 0, single buffered']
    #allocation3 [shape = 's32[1]{0}', space=sflag, size = 0x4, scoped, tag = 'scoped memory for tpu_custom_call.1']
    #allocation4 [shape = 's32[1]{0}', space=sflag, size = 0x4, scoped, tag = 'scoped memory for tpu_custom_call.1']
    #allocation5 [shape = 'u8[131072]{0}', space=vmem, size = 0x20000, scoped, tag = 'input window, operand 1, single buffered']
    #allocation6 [shape = 's32[1]{0}', space=sflag, size = 0x4, scoped, tag = 'scoped memory for tpu_custom_call.1']
    #allocation7 [shape = 'u8[8192]{0}', space=vmem, size = 0x2000, scoped, tag = 'output window, operand 0, single buffered']
    %7 = vsyncpa [#allocation3], 0
    %8 = vsyncpa [#allocation6], 0
    %9 = vsyncpa [#allocation4], 0
    // Predicated region
    $region2: #{tpu_custom_call.1} parent=1 // pred_check
      _
    $region3: #{tpu_custom_call.1} parent=1 // pred_check_branch
      %11 = sbr.rel (0) target = $region5
    $region4: #{tpu_custom_call.1} parent=1 // pred_region
      %13 = vsyncadd [#allocation3], 0
      %s15 = sshll.u32 %s0, 4
      %s16 = int_to_ptr.hbm [resolvable:$true] %s15
      %s17 = sshll.u32 [#allocation2], 4
      %s18 = int_to_ptr.vmem [resolvable:$true] %s17
      %20 = dma.hbm_to_vmem [thread:$0]  %s16, 128, %s18, [#allocation3]
    $region5: #{tpu_custom_call.1} parent=1 // pred_fallthru
      _
    // Predicated region
    $region6: #{tpu_custom_call.1} parent=1 // pred_check
      _
    $region7: #{tpu_custom_call.1} parent=1 // pred_check_branch
      %22 = sbr.rel (0) target = $region9
    $region8: #{tpu_custom_call.1} parent=1 // pred_region
      %24 = vsyncadd [#allocation6], 0
      %s25 = sshll.u32 %s1, 4
      %s26 = int_to_ptr.hbm [resolvable:$true] %s25
      %s27 = sshll.u32 [#allocation5], 4
      %s28 = int_to_ptr.vmem [resolvable:$true] %s27
      %33 = dma.hbm_to_vmem [thread:$0]  %s26, 4096, %s28, [#allocation6], 256, 256, 16
    $region9: #{tpu_custom_call.1} parent=1 // pred_fallthru
      _
    // Predicated region
    $region10: #{tpu_custom_call.1} parent=1 // pred_check
      _
    $region11: #{tpu_custom_call.1} parent=1 // pred_check_branch
      %35 = sbr.rel (0) target = $region13
    $region12: #{tpu_custom_call.1} parent=1 // pred_region
      %37 = dma.done [#allocation3], 128
    $region13: #{tpu_custom_call.1} parent=1 // pred_fallthru
      _
    // Predicated region
    $region14: #{tpu_custom_call.1} parent=1 // pred_check
      _
    $region15: #{tpu_custom_call.1} parent=1 // pred_check_branch
      %39 = sbr.rel (0) target = $region17
    $region16: #{tpu_custom_call.1} parent=1 // pred_region
      %41 = dma.done [#allocation6], 4096
    $region17: #{tpu_custom_call.1} parent=1 // pred_fallthru
      _
    %v42 = vld [vmem:[#allocation2] sm:$0xff]
    %v43 = vld [vmem:[#allocation5] sm:$0xff]
    %v44 = vld [vmem:[#allocation5 + $0x8] sm:$0xff]
    %v45 = vld [vmem:[#allocation5 + $0x10] sm:$0xff]
    %v46 = vld [vmem:[#allocation5 + $0x18] sm:$0xff]
    %v47 = vld [vmem:[#allocation5 + $0x20] sm:$0xff]
    %v48 = vld [vmem:[#allocation5 + $0x28] sm:$0xff]
    %v49 = vld [vmem:[#allocation5 + $0x30] sm:$0xff]
    %v50 = vld [vmem:[#allocation5 + $0x38] sm:$0xff]
    %v51 = vld [vmem:[#allocation5 + $0x40] sm:$0xff]
    %v52 = vld [vmem:[#allocation5 + $0x48] sm:$0xff]
    %v53 = vld [vmem:[#allocation5 + $0x50] sm:$0xff]
    %v54 = vld [vmem:[#allocation5 + $0x58] sm:$0xff]
    %v55 = vld [vmem:[#allocation5 + $0x60] sm:$0xff]
    %v56 = vld [vmem:[#allocation5 + $0x68] sm:$0xff]
    %v57 = vld [vmem:[#allocation5 + $0x70] sm:$0xff]
    %v58 = vld [vmem:[#allocation5 + $0x78] sm:$0xff]
    %v59 = vld [vmem:[#allocation5 + $0x80] sm:$0xff]
    %v60 = vld [vmem:[#allocation5 + $0x88] sm:$0xff]
    %v61 = vld [vmem:[#allocation5 + $0x90] sm:$0xff]
    %v62 = vld [vmem:[#allocation5 + $0x98] sm:$0xff]
    %v63 = vld [vmem:[#allocation5 + $0xa0] sm:$0xff]
    %v64 = vld [vmem:[#allocation5 + $0xa8] sm:$0xff]
    %v65 = vld [vmem:[#allocation5 + $0xb0] sm:$0xff]
    %v66 = vld [vmem:[#allocation5 + $0xb8] sm:$0xff]
    %v67 = vld [vmem:[#allocation5 + $0xc0] sm:$0xff]
    %v68 = vld [vmem:[#allocation5 + $0xc8] sm:$0xff]
    %v69 = vld [vmem:[#allocation5 + $0xd0] sm:$0xff]
    %v70 = vld [vmem:[#allocation5 + $0xd8] sm:$0xff]
    %v71 = vld [vmem:[#allocation5 + $0xe0] sm:$0xff]
    %v72 = vld [vmem:[#allocation5 + $0xe8] sm:$0xff]
    %v73 = vld [vmem:[#allocation5 + $0xf0] sm:$0xff]
    %v74 = vld [vmem:[#allocation5 + $0xf8] sm:$0xff]
    %75 = vset.pattern.permute.xlu0 0
    %76 = vperm.xlu0 %75, %v42
    %v77 = vpop.permute.xlu0 %76
    %78 = vset.pattern.permute.xlu0 1
    %79 = vperm.xlu0 %78, %v42
    %v80 = vpop.permute.xlu0 %79
    %81 = vset.pattern.permute.xlu0 2
    %82 = vperm.xlu0 %81, %v42
    %v83 = vpop.permute.xlu0 %82
    %84 = vset.pattern.permute.xlu0 3
    %85 = vperm.xlu0 %84, %v42
    %v86 = vpop.permute.xlu0 %85
    %87 = vset.pattern.permute.xlu0 4
    %88 = vperm.xlu0 %87, %v42
    %v89 = vpop.permute.xlu0 %88
    %90 = vset.pattern.permute.xlu0 5
    %91 = vperm.xlu0 %90, %v42
    %v92 = vpop.permute.xlu0 %91
    %93 = vset.pattern.permute.xlu0 6
    %94 = vperm.xlu0 %93, %v42
    %v95 = vpop.permute.xlu0 %94
    %96 = vset.pattern.permute.xlu0 7
    %97 = vperm.xlu0 %96, %v42
    %v98 = vpop.permute.xlu0 %97
    %vm99 = vcmask 130048
    %v100 = vsel %vm99, %v77, %v80
    %vm101 = vcmask 261120
    %v102 = vsel %vm101, %v100, %v83
    %vm103 = vcmask 392192
    %v104 = vsel %vm103, %v102, %v86
    %vm105 = vcmask 523264
    %v106 = vsel %vm105, %v104, %v89
    %vm107 = vcmask 654336
    %v108 = vsel %vm107, %v106, %v92
    %vm109 = vcmask 785408
    %v110 = vsel %vm109, %v108, %v95
    %vm111 = vcmask 916480
    %v112 = vsel %vm111, %v110, %v98
    %v113 = vlaneseq
    %v114 = vand.u32 %v113, 127
    %vm115 = vcmp.eq.s32.totalorder %v112, %v114
    %v116 = vsel %vm115, 1, 0
    %v117 = vcvt.s32.f32 %v116
    %118 = vmatpush.msra.mxu0 %v73
    %119 = vmatpush.msra.mxu0 %v71
    %120 = vmatpush.msra.mxu0 %v69
    %121 = vmatpush.msra.mxu0 %v67
    %122 = vmatpush.msra.mxu0 %v65
    %123 = vmatpush.msra.mxu0 %v63
    %124 = vmatpush.msra.mxu0 %v61
    %125 = vmatpush.msra.mxu0 %v59
    %126 = vmatpush.msra.mxu0 %v57
    %127 = vmatpush.msra.mxu0 %v55
    %128 = vmatpush.msra.mxu0 %v53
    %129 = vmatpush.msra.mxu0 %v51
    %130 = vmatpush.msra.mxu0 %v49
    %131 = vmatpush.msra.mxu0 %v47
    %132 = vmatpush.msra.mxu0 %v45
    %133 = vmatpush.msra.mxu0 %v43
    %134 = vmatmul.f32.gmra.mxu0 %v117
    %v135 = vpop.f32.mrf.mxu0
    %v136 = vadd.f32 0.0, %v135
    %137 = vdwg.mxu0
    %138 = vmatpush.msra.mxu0 %v74
    %139 = vmatpush.msra.mxu0 %v72
    %140 = vmatpush.msra.mxu0 %v70
    %141 = vmatpush.msra.mxu0 %v68
    %142 = vmatpush.msra.mxu0 %v66
    %143 = vmatpush.msra.mxu0 %v64
    %144 = vmatpush.msra.mxu0 %v62
    %145 = vmatpush.msra.mxu0 %v60
    %146 = vmatpush.msra.mxu0 %v58
    %147 = vmatpush.msra.mxu0 %v56
    %148 = vmatpush.msra.mxu0 %v54
    %149 = vmatpush.msra.mxu0 %v52
    %150 = vmatpush.msra.mxu0 %v50
    %151 = vmatpush.msra.mxu0 %v48
    %152 = vmatpush.msra.mxu0 %v46
    %153 = vmatpush.msra.mxu0 %v44
    %154 = vmatmul.f32.gmra.mxu0 %v117
    %v155 = vpop.f32.mrf.mxu0
    %v156 = vadd.f32 0.0, %v155
    %157 = vdwg.mxu0
    %158 = vst [vmem:[#allocation7] sm:$0xff] %v136
    %159 = vst [vmem:[#allocation7 + $0x8] sm:$0xff] %v156
    // Predicated region
    $region18: #{tpu_custom_call.1} parent=1 // pred_check
      _
    $region19: #{tpu_custom_call.1} parent=1 // pred_check_branch
      %161 = sbr.rel (0) target = $region21
    $region20: #{tpu_custom_call.1} parent=1 // pred_region
      %163 = vsyncadd [#allocation4], 0
      %s165 = sshll.u32 [#allocation7], 4
      %s166 = int_to_ptr.vmem [resolvable:$true] %s165
      %s167 = sshll.u32 %s2, 4
      %s168 = int_to_ptr.hbm [resolvable:$true] %s167
      %170 = dma.vmem_to_hbm [thread:$0]  %s166, 256, %s168, [#allocation4]
    $region21: #{tpu_custom_call.1} parent=1 // pred_fallthru
      _
    // Predicated region
    $region22: #{tpu_custom_call.1} parent=1 // pred_check
      _
    $region23: #{tpu_custom_call.1} parent=1 // pred_check_branch
      %172 = sbr.rel (0) target = $region25
    $region24: #{tpu_custom_call.1} parent=1 // pred_region
      %174 = dma.done [#allocation4], 256
    $region25: #{tpu_custom_call.1} parent=1 // pred_fallthru
      _
    %175 = vsyncpa [#allocation3], 1
    %176 = vsyncpa [#allocation6], 1
    %177 = vsyncpa [#allocation4], 1

// kernel: tpu_custom_call.1
$region0: #{tpu_custom_call.1}
  #allocation0 [shape = 'u32[]', space=smem, size = 0x4, offset = 0x4, fixed_abs, tag = 'smem constant byte address 0x4 - core index']
  #allocation1 [shape = 'u32[72,128]{1,0:T(1,128)}', space=vmem, size = 0x9000, scoped, tag = 'internal scratch']
  %s0 = inlined_call_operand.hbm [shape: s32[8,8], index: 0, kind: input, shape index: {}]
  %s1 = inlined_call_operand.hbm [shape: f32[128,256], index: 1, kind: input, shape index: {}]
  %s2 = inlined_call_operand.hbm [shape: f32[8,256], index: 2, kind: output, shape index: {}]
  %s3 = sld [smem:[#allocation0]]
  $region26: #{tpu_custom_call.1} parent=0
    _
  %s5 = ssub.s32 1, %s3
  %s6 = scalar_select 0, %s5, %s3
  $region1: #{tpu_custom_call.1} parent=0
    #allocation2 [shape = 'u8[4096]{0}', space=vmem, size = 0x1000, scoped, tag = 'input window, operand 0, single buffered']
    #allocation3 [shape = 's32[1]{0}', space=sflag, size = 0x4, scoped, tag = 'scoped memory for tpu_custom_call.1']
    #allocation4 [shape = 's32[1]{0}', space=sflag, size = 0x4, scoped, tag = 'scoped memory for tpu_custom_call.1']
    #allocation5 [shape = 'u8[131072]{0}', space=vmem, size = 0x20000, scoped, tag = 'input window, operand 1, single buffered']
    #allocation6 [shape = 's32[1]{0}', space=sflag, size = 0x4, scoped, tag = 'scoped memory for tpu_custom_call.1']
    #allocation7 [shape = 'u8[8192]{0}', space=vmem, size = 0x2000, scoped, tag = 'output window, operand 0, single buffered']
    %7 = vsyncpa [#allocation3], 0
    %8 = vsyncpa [#allocation6], 0
    %9 = vsyncpa [#allocation4], 0
    // Predicated region
    $region2: #{tpu_custom_call.1} parent=1 // pred_check
      _
    $region3: #{tpu_custom_call.1} parent=1 // pred_check_branch
      %11 = sbr.rel (0) target = $region5
    $region4: #{tpu_custom_call.1} parent=1 // pred_region
      %13 = vsyncadd [#allocation3], 0
      %s15 = sshll.u32 %s0, 4
      %s16 = int_to_ptr.hbm [resolvable:$true] %s15
      %s17 = sshll.u32 [#allocation2], 4
      %s18 = int_to_ptr.vmem [resolvable:$true] %s17
      %20 = dma.hbm_to_vmem [thread:$0]  %s16, 128, %s18, [#allocation3]
    $region5: #{tpu_custom_call.1} parent=1 // pred_fallthru
      _
    // Predicated region
    $region6: #{tpu_custom_call.1} parent=1 // pred_check
      _
    $region7: #{tpu_custom_call.1} parent=1 // pred_check_branch
      %22 = sbr.rel (0) target = $region9
    $region8: #{tpu_custom_call.1} parent=1 // pred_region
      %24 = vsyncadd [#allocation6], 0
      %s25 = sshll.u32 %s1, 4
      %s26 = int_to_ptr.hbm [resolvable:$true] %s25
      %s27 = sshll.u32 [#allocation5], 4
      %s28 = int_to_ptr.vmem [resolvable:$true] %s27
      %33 = dma.hbm_to_vmem [thread:$0]  %s26, 4096, %s28, [#allocation6], 256, 256, 16
    $region9: #{tpu_custom_call.1} parent=1 // pred_fallthru
      _
    // Predicated region
    $region10: #{tpu_custom_call.1} parent=1 // pred_check
      _
    $region11: #{tpu_custom_call.1} parent=1 // pred_check_branch
      %35 = sbr.rel (0) target = $region13
    $region12: #{tpu_custom_call.1} parent=1 // pred_region
      %37 = dma.done [#allocation3], 128
    $region13: #{tpu_custom_call.1} parent=1 // pred_fallthru
      _
    // Predicated region
    $region14: #{tpu_custom_call.1} parent=1 // pred_check
      _
    $region15: #{tpu_custom_call.1} parent=1 // pred_check_branch
      %39 = sbr.rel (0) target = $region17
    $region16: #{tpu_custom_call.1} parent=1 // pred_region
      %41 = dma.done [#allocation6], 4096
    $region17: #{tpu_custom_call.1} parent=1 // pred_fallthru
      _
    %v42 = vld [vmem:[#allocation2] sm:$0xff]
    %v43 = vld [vmem:[#allocation5] sm:$0xff]
    %v44 = vld [vmem:[#allocation5 + $0x8] sm:$0xff]
    %v45 = vld [vmem:[#allocation5 + $0x10] sm:$0xff]
    %v46 = vld [vmem:[#allocation5 + $0x18] sm:$0xff]
    %v47 = vld [vmem:[#allocation5 + $0x20] sm:$0xff]
    %v48 = vld [vmem:[#allocation5 + $0x28] sm:$0xff]
    %v49 = vld [vmem:[#allocation5 + $0x30] sm:$0xff]
    %v50 = vld [vmem:[#allocation5 + $0x38] sm:$0xff]
    %v51 = vld [vmem:[#allocation5 + $0x40] sm:$0xff]
    %v52 = vld [vmem:[#allocation5 + $0x48] sm:$0xff]
    %v53 = vld [vmem:[#allocation5 + $0x50] sm:$0xff]
    %v54 = vld [vmem:[#allocation5 + $0x58] sm:$0xff]
    %v55 = vld [vmem:[#allocation5 + $0x60] sm:$0xff]
    %v56 = vld [vmem:[#allocation5 + $0x68] sm:$0xff]
    %v57 = vld [vmem:[#allocation5 + $0x70] sm:$0xff]
    %v58 = vld [vmem:[#allocation5 + $0x78] sm:$0xff]
    %v59 = vld [vmem:[#allocation5 + $0x80] sm:$0xff]
    %v60 = vld [vmem:[#allocation5 + $0x88] sm:$0xff]
    %v61 = vld [vmem:[#allocation5 + $0x90] sm:$0xff]
    %v62 = vld [vmem:[#allocation5 + $0x98] sm:$0xff]
    %v63 = vld [vmem:[#allocation5 + $0xa0] sm:$0xff]
    %v64 = vld [vmem:[#allocation5 + $0xa8] sm:$0xff]
    %v65 = vld [vmem:[#allocation5 + $0xb0] sm:$0xff]
    %v66 = vld [vmem:[#allocation5 + $0xb8] sm:$0xff]
    %v67 = vld [vmem:[#allocation5 + $0xc0] sm:$0xff]
    %v68 = vld [vmem:[#allocation5 + $0xc8] sm:$0xff]
    %v69 = vld [vmem:[#allocation5 + $0xd0] sm:$0xff]
    %v70 = vld [vmem:[#allocation5 + $0xd8] sm:$0xff]
    %v71 = vld [vmem:[#allocation5 + $0xe0] sm:$0xff]
    %v72 = vld [vmem:[#allocation5 + $0xe8] sm:$0xff]
    %v73 = vld [vmem:[#allocation5 + $0xf0] sm:$0xff]
    %v74 = vld [vmem:[#allocation5 + $0xf8] sm:$0xff]
    %75 = vset.pattern.permute.xlu0 0
    %76 = vperm.xlu0 %75, %v42
    %v77 = vpop.permute.xlu0 %76
    %78 = vset.pattern.permute.xlu0 1
    %79 = vperm.xlu0 %78, %v42
    %v80 = vpop.permute.xlu0 %79
    %81 = vset.pattern.permute.xlu0 2
    %82 = vperm.xlu0 %81, %v42
    %v83 = vpop.permute.xlu0 %82
    %84 = vset.pattern.permute.xlu0 3
    %85 = vperm.xlu0 %84, %v42
    %v86 = vpop.permute.xlu0 %85
    %87 = vset.pattern.permute.xlu0 4
    %88 = vperm.xlu0 %87, %v42
    %v89 = vpop.permute.xlu0 %88
    %90 = vset.pattern.permute.xlu0 5
    %91 = vperm.xlu0 %90, %v42
    %v92 = vpop.permute.xlu0 %91
    %93 = vset.pattern.permute.xlu0 6
    %94 = vperm.xlu0 %93, %v42
    %v95 = vpop.permute.xlu0 %94
    %96 = vset.pattern.permute.xlu0 7
    %97 = vperm.xlu0 %96, %v42
    %v98 = vpop.permute.xlu0 %97
    %vm99 = vcmask 130048
    %v100 = vsel %vm99, %v77, %v80
    %vm101 = vcmask 261120
    %v102 = vsel %vm101, %v100, %v83
    %vm103 = vcmask 392192
    %v104 = vsel %vm103, %v102, %v86
    %vm105 = vcmask 523264
    %v106 = vsel %vm105, %v104, %v89
    %vm107 = vcmask 654336
    %v108 = vsel %vm107, %v106, %v92
    %vm109 = vcmask 785408
    %v110 = vsel %vm109, %v108, %v95
    %vm111 = vcmask 916480
    %v112 = vsel %vm111, %v110, %v98
    %v113 = vlaneseq
    %v114 = vand.u32 %v113, 127
    %vm115 = vcmp.eq.s32.totalorder %v112, %v114
    %v116 = vsel %vm115, 1, 0
    %v117 = vcvt.s32.f32 %v116
    %118 = vmatpush.msra.mxu0 %v73
    %119 = vmatpush.msra.mxu0 %v71
    %120 = vmatpush.msra.mxu0 %v69
    %121 = vmatpush.msra.mxu0 %v67
    %122 = vmatpush.msra.mxu0 %v65
    %123 = vmatpush.msra.mxu0 %v63
    %124 = vmatpush.msra.mxu0 %v61
    %125 = vmatpush.msra.mxu0 %v59
    %126 = vmatpush.msra.mxu0 %v57
    %127 = vmatpush.msra.mxu0 %v55
    %128 = vmatpush.msra.mxu0 %v53
    %129 = vmatpush.msra.mxu0 %v51
    %130 = vmatpush.msra.mxu0 %v49
    %131 = vmatpush.msra.mxu0 %v47
    %132 = vmatpush.msra.mxu0 %v45
    %133 = vmatpush.msra.mxu0 %v43
    %134 = vmatmul.f32.gmra.mxu0 %v117
    %v135 = vpop.f32.mrf.mxu0
    %v136 = vadd.f32 0.0, %v135
    %137 = vdwg.mxu0
    %138 = vmatpush.msra.mxu0 %v74
    %139 = vmatpush.msra.mxu0 %v72
    %140 = vmatpush.msra.mxu0 %v70
    %141 = vmatpush.msra.mxu0 %v68
    %142 = vmatpush.msra.mxu0 %v66
    %143 = vmatpush.msra.mxu0 %v64
    %144 = vmatpush.msra.mxu0 %v62
    %145 = vmatpush.msra.mxu0 %v60
    %146 = vmatpush.msra.mxu0 %v58
    %147 = vmatpush.msra.mxu0 %v56
    %148 = vmatpush.msra.mxu0 %v54
    %149 = vmatpush.msra.mxu0 %v52
    %150 = vmatpush.msra.mxu0 %v50
    %151 = vmatpush.msra.mxu0 %v48
    %152 = vmatpush.msra.mxu0 %v46
    %153 = vmatpush.msra.mxu0 %v44
    %154 = vmatmul.f32.gmra.mxu0 %v117
    %v155 = vpop.f32.mrf.mxu0
    %v156 = vadd.f32 0.0, %v155
    %157 = vdwg.mxu0
    %158 = vst [vmem:[#allocation7] sm:$0xff] %v136
    %159 = vst [vmem:[#allocation7 + $0x8] sm:$0xff] %v156
    // Predicated region
    $region18: #{tpu_custom_call.1} parent=1 // pred_check
      _
    $region19: #{tpu_custom_call.1} parent=1 // pred_check_branch
      %161 = sbr.rel (0) target = $region21
    $region20: #{tpu_custom_call.1} parent=1 // pred_region
      %163 = vsyncadd [#allocation4], 0
      %s165 = sshll.u32 [#allocation7], 4
      %s166 = int_to_ptr.vmem [resolvable:$true] %s165
      %s167 = sshll.u32 %s2, 4
      %s168 = int_to_ptr.hbm [resolvable:$true] %s167
      %170 = dma.vmem_to_hbm [thread:$0]  %s166, 256, %s168, [#allocation4]
    $region21: #{tpu_custom_call.1} parent=1 // pred_fallthru
      _
    // Predicated region
    $region22: #{tpu_custom_call.1} parent=1 // pred_check
      _
    $region23: #{tpu_custom_call.1} parent=1 // pred_check_branch
      %172 = sbr.rel (0) target = $region25
    $region24: #{tpu_custom_call.1} parent=1 // pred_region
      %174 = dma.done [#allocation4], 256
    $region25: #{tpu_custom_call.1} parent=1 // pred_fallthru
      _
    %175 = vsyncpa [#allocation3], 1
    %176 = vsyncpa [#allocation6], 1
    %177 = vsyncpa [#allocation4], 1

</llo_original>
